<compile_context>
chip_gen: v7x
topology: tpu7x:2x2x1
jax: 0.10.0
libtpu: 0.0.40
codegen_flags: <defaults>
</compile_context>

<pallas_src>
import itertools

import jax
import jax.numpy as jnp
from jax.experimental import pallas as pl
from jax.experimental.pallas import tpu as pltpu


TILE_T = 128  # triplets processed per grid step (lane-dense)


class AllTripletSelector:
    """Host-side triplet selector: every (anchor, positive, negative) triple."""

    def get_triplets(self, labels):
        labels = [int(l) for l in labels]
        triplets = []
        for lab in sorted(set(labels)):
            pos_idx = [i for i, l in enumerate(labels) if l == lab]
            neg_idx = [i for i, l in enumerate(labels) if l != lab]
            if len(pos_idx) < 2 or len(neg_idx) == 0:
                continue
            for a, p in itertools.combinations(pos_idx, 2):
                for n in neg_idx:
                    triplets.append((a, p, n))
        return jnp.asarray(triplets, dtype=jnp.int32)  # (T, 3)


def _make_triplet_loss_kernel(margin, B, tile_t):
    margin = float(margin)

    def kernel(cnt_ref, trip_ref, emb_ref, out_ref, gram_ref, sq_ref, acc_ref):
        # cnt_ref : (1,)  int32  SMEM scalar prefetch — real triplet count T
        # trip_ref: (3, tile_t) int32 VMEM — [a; p; n] indices, lane-dense
        # emb_ref : (B, D) VMEM — full embeddings, resident across the grid
        # out_ref : (1, 1) f32 — mean loss
        # gram_ref: (B, B) f32 scratch — E @ E.T
        # sq_ref  : (B, 1) f32 scratch — row squared norms
        # acc_ref : (1, tile_t) f32 scratch — lane-wide partial loss sums
        t = pl.program_id(0)

        @pl.when(t == 0)
        def _init():
            e = emb_ref[...].astype(jnp.float32)                        # (B, D)
            gram_ref[...] = jax.lax.dot_general(
                e, e, (((1,), (1,)), ((), ())),
                preferred_element_type=jnp.float32)                      # (B, B) MXU
            sq_ref[...] = jnp.sum(e * e, axis=1, keepdims=True)          # (B, 1)
            acc_ref[...] = jnp.zeros_like(acc_ref)

        trips = trip_ref[...]                                            # (3, tile_t)
        a_idx = trips[0:1, :]                                            # (1, tile_t)
        p_idx = trips[1:2, :]
        n_idx = trips[2:3, :]

        row = jax.lax.broadcasted_iota(jnp.int32, (B, tile_t), 0)        # row index i
        a_oh = (row == a_idx).astype(jnp.float32)                        # (B, tile_t)
        p_oh = (row == p_idx).astype(jnp.float32)
        n_oh = (row == n_idx).astype(jnp.float32)

        # Column t of g_a = gram[:, a_t] = anchor dot-products with every row.
        g_a = jnp.dot(gram_ref[...], a_oh,
                      preferred_element_type=jnp.float32)                # (B, tile_t) MXU
        g_ap = jnp.sum(p_oh * g_a, axis=0, keepdims=True)                # (1, tile_t)
        g_an = jnp.sum(n_oh * g_a, axis=0, keepdims=True)

        sq = sq_ref[...]                                                 # (B, 1)
        sq_p = jnp.sum(p_oh * sq, axis=0, keepdims=True)                 # (1, tile_t)
        sq_n = jnp.sum(n_oh * sq, axis=0, keepdims=True)

        # ap - an = |p|^2 - |n|^2 - 2 * (a.p - a.n); anchor norm cancels.
        losses = jnp.maximum(sq_p - sq_n - 2.0 * (g_ap - g_an) + margin, 0.0)

        lane = jax.lax.broadcasted_iota(jnp.int32, (1, tile_t), 1)
        gidx = t * tile_t + lane
        valid = gidx < cnt_ref[0]
        acc_ref[...] += jnp.where(valid, losses, 0.0)

        @pl.when(t == pl.num_programs(0) - 1)
        def _finalize():
            total = jnp.sum(acc_ref[...], axis=1, keepdims=True)         # (1, 1)
            cnt = jnp.maximum(cnt_ref[0], 1).astype(jnp.float32)
            out_ref[...] = total / cnt

    return kernel


def online_triplet_loss(embeddings, triplets, margin, tile_t=TILE_T):
    """Pallas implementation of OnlineTripletLoss.forward given precomputed triplets."""
    B, D = embeddings.shape
    T = int(triplets.shape[0])
    if T == 0:
        # Guard: mean over an empty set is undefined; return 0 loss, 0 triplets.
        return jnp.float32(0.0), 0

    # Bucket the number of tiles to a power of 2 so varying T rarely recompiles.
    num_tiles = int(pl.next_power_of_2(pl.cdiv(T, tile_t)))
    t_pad = num_tiles * tile_t

    trips = jnp.zeros((3, t_pad), dtype=jnp.int32)
    trips = trips.at[:, :T].set(triplets.astype(jnp.int32).T)            # (3, T_pad)
    count = jnp.asarray([T], dtype=jnp.int32)

    kernel = _make_triplet_loss_kernel(margin, B, tile_t)

    grid_spec = pltpu.PrefetchScalarGridSpec(
        num_scalar_prefetch=1,                     # the real triplet count (SMEM)
        grid=(num_tiles,),
        in_specs=[
            pl.BlockSpec((3, tile_t), lambda t, cnt: (0, t)),   # triplet index tile
            pl.BlockSpec((B, D), lambda t, cnt: (0, 0)),        # resident embeddings
        ],
        out_specs=pl.BlockSpec((1, 1), lambda t, cnt: (0, 0)),
        scratch_shapes=[
            pltpu.VMEM((B, B), jnp.float32),       # Gram matrix E @ E.T
            pltpu.VMEM((B, 1), jnp.float32),       # squared row norms
            pltpu.VMEM((1, tile_t), jnp.float32),  # lane-wide partial loss sums
        ],
    )

    out = pl.pallas_call(
        kernel,
        out_shape=jax.ShapeDtypeStruct((1, 1), jnp.float32),
        grid_spec=grid_spec,
        compiler_params=pltpu.CompilerParams(
            dimension_semantics=("arbitrary",)),   # accumulator across tiles
    )(count, trips, embeddings)

    return out[0, 0], T


if __name__ == "__main__":
    key = jax.random.PRNGKey(0)
    B, D = 8, 32
    margin = 1.0

    embeddings = jax.random.normal(key, (B, D), dtype=jnp.float32)
    target = jnp.array([0, 0, 0, 0, 1, 1, 1, 1], dtype=jnp.int32)

    selector = AllTripletSelector()
    triplets = selector.get_triplets(target)  # (T, 3), T = 48 here

    loss, n_triplets = online_triplet_loss(embeddings, triplets, margin)
    loss = jax.block_until_ready(loss)

    # Pure-JAX reference (direct squared-distance form).
    ea = embeddings[triplets[:, 0]]
    ep = embeddings[triplets[:, 1]]
    en = embeddings[triplets[:, 2]]
    ap_ref = jnp.sum((ea - ep) ** 2, axis=1)
    an_ref = jnp.sum((ea - en) ** 2, axis=1)
    ref = jnp.mean(jnp.maximum(ap_ref - an_ref + margin, 0.0))

    assert n_triplets == int(triplets.shape[0])
    assert jnp.allclose(loss, ref, rtol=1e-4, atol=1e-4), (float(loss), float(ref))
    print("KERNEL_OK")
</pallas_src>

<mosaic_0001>
module attributes {stable_mosaic.version = 11 : i64} {
  func.func @kernel(%arg0: i32, %arg1: memref<1xi32, #tpu.memory_space<smem>>, %arg2: memref<3x128xi32, #tpu.memory_space<vmem>>, %arg3: memref<8x32xf32, #tpu.memory_space<vmem>>, %arg4: memref<1x1xf32, #tpu.memory_space<vmem>>, %arg5: memref<8x8xf32, #tpu.memory_space<vmem>>, %arg6: memref<8x1xf32, #tpu.memory_space<vmem>>, %arg7: memref<1x128xf32, #tpu.memory_space<vmem>>) attributes {dimension_semantics = [#tpu.dimension_semantics<arbitrary>], iteration_bounds = array<i64: 1>, scalar_prefetch = 1 : i64, scratch_operands = 3 : i64, tpu.core_type = #tpu.core_type<tc>, window_params = [{transform_indices = @transform_0, window_bounds = array<i64: 3, 128>}, {pipeline_mode = #tpu.pipeline_mode<synchronous>, transform_indices = @transform_1, window_bounds = array<i64: 8, 32>}, {pipeline_mode = #tpu.pipeline_mode<synchronous>, transform_indices = @transform_2, window_bounds = array<i64: 1, 1>}]} {
    %c0_i32 = arith.constant 0 : i32
    %0 = arith.cmpi eq, %arg0, %c0_i32 : i32
    %1 = arith.extui %0 : i1 to i32
    %c0_i32_0 = arith.constant 0 : i32
    %2 = arith.cmpi ne, %1, %c0_i32_0 : i32
    scf.if %2 {
      %c0_21 = arith.constant 0 : index
      %c0_22 = arith.constant 0 : index
      %61 = vector.load %arg3[%c0_21, %c0_22] : memref<8x32xf32, #tpu.memory_space<vmem>>, vector<8x32xf32>
      %cst_23 = arith.constant dense<0.000000e+00> : vector<8x8xf32>
      %62 = tpu.matmul %61, %61, %cst_23 {dimension_numbers = #tpu.dot_dimension_numbers<[1], [1], [0], [0], [0, 0, 1, 0], [], []>} : vector<8x32xf32>, vector<8x32xf32>, vector<8x8xf32> -> vector<8x8xf32>
      %c0_24 = arith.constant 0 : index
      %c0_25 = arith.constant 0 : index
      %63 = vector.load %arg5[%c0_24, %c0_25] : memref<8x8xf32, #tpu.memory_space<vmem>>, vector<8x8xf32>
      tpu.vector_store %arg5[%c0_24, %c0_25], %62 {strides = array<i32>} : memref<8x8xf32, #tpu.memory_space<vmem>>, vector<8x8xf32>,
      %64 = arith.mulf %61, %61 : vector<8x32xf32>
      %cst_26 = arith.constant dense<0.000000e+00> : vector<8xf32>
      %65 = vector.multi_reduction <add>, %64, %cst_26 [1] : vector<8x32xf32> to vector<8xf32>
      %66 = vector.shape_cast %65 : vector<8xf32> to vector<8x1xf32>
      %c0_27 = arith.constant 0 : index
      %c0_28 = arith.constant 0 : index
      %67 = vector.load %arg6[%c0_27, %c0_28] : memref<8x1xf32, #tpu.memory_space<vmem>>, vector<8x1xf32>
      tpu.vector_store %arg6[%c0_27, %c0_28], %66 {strides = array<i32>} : memref<8x1xf32, #tpu.memory_space<vmem>>, vector<8x1xf32>,
      %cst_29 = arith.constant 0.000000e+00 : f32
      %68 = vector.broadcast %cst_29 : f32 to vector<1x128xf32>
      %c0_30 = arith.constant 0 : index
      %c0_31 = arith.constant 0 : index
      %69 = vector.load %arg7[%c0_30, %c0_31] : memref<1x128xf32, #tpu.memory_space<vmem>>, vector<1x128xf32>
      tpu.vector_store %arg7[%c0_30, %c0_31], %68 {strides = array<i32>} : memref<1x128xf32, #tpu.memory_space<vmem>>, vector<1x128xf32>,
    } else {
    }
    %c0 = arith.constant 0 : index
    %c0_1 = arith.constant 0 : index
    %3 = vector.load %arg2[%c0, %c0_1] : memref<3x128xi32, #tpu.memory_space<vmem>>, vector<3x128xi32>
    %4 = vector.extract_strided_slice %3 {offsets = [0, 0], sizes = [1, 128], strides = [1, 1]} : vector<3x128xi32> to vector<1x128xi32>
    %5 = vector.extract_strided_slice %3 {offsets = [1, 0], sizes = [1, 128], strides = [1, 1]} : vector<3x128xi32> to vector<1x128xi32>
    %6 = vector.extract_strided_slice %3 {offsets = [2, 0], sizes = [1, 128], strides = [1, 1]} : vector<3x128xi32> to vector<1x128xi32>
    %7 = tpu.iota {dimensions = array<i32: 0>} : vector<8x128xi32>
    %8 = vector.broadcast %4 : vector<1x128xi32> to vector<8x128xi32>
    %9 = arith.cmpi eq, %7, %8 : vector<8x128xi32>
    %10 = arith.extui %9 : vector<8x128xi1> to vector<8x128xi32>
    %11 = arith.sitofp %10 : vector<8x128xi32> to vector<8x128xf32>
    %12 = vector.broadcast %5 : vector<1x128xi32> to vector<8x128xi32>
    %13 = arith.cmpi eq, %7, %12 : vector<8x128xi32>
    %14 = arith.extui %13 : vector<8x128xi1> to vector<8x128xi32>
    %15 = arith.sitofp %14 : vector<8x128xi32> to vector<8x128xf32>
    %16 = vector.broadcast %6 : vector<1x128xi32> to vector<8x128xi32>
    %17 = arith.cmpi eq, %7, %16 : vector<8x128xi32>
    %18 = arith.extui %17 : vector<8x128xi1> to vector<8x128xi32>
    %19 = arith.sitofp %18 : vector<8x128xi32> to vector<8x128xf32>
    %c0_2 = arith.constant 0 : index
    %c0_3 = arith.constant 0 : index
    %20 = vector.load %arg5[%c0_2, %c0_3] : memref<8x8xf32, #tpu.memory_space<vmem>>, vector<8x8xf32>
    %cst = arith.constant dense<0.000000e+00> : vector<8x128xf32>
    %21 = tpu.matmul %20, %11, %cst {dimension_numbers = #tpu.dot_dimension_numbers<[1], [0], [0], [1], [0, 0, 1, 1], [], []>} : vector<8x8xf32>, vector<8x128xf32>, vector<8x128xf32> -> vector<8x128xf32>
    %22 = arith.mulf %15, %21 : vector<8x128xf32>
    %cst_4 = arith.constant dense<0.000000e+00> : vector<128xf32>
    %23 = vector.multi_reduction <add>, %22, %cst_4 [0] : vector<8x128xf32> to vector<128xf32>
    %24 = vector.shape_cast %23 : vector<128xf32> to vector<1x128xf32>
    %25 = arith.mulf %19, %21 : vector<8x128xf32>
    %cst_5 = arith.constant dense<0.000000e+00> : vector<128xf32>
    %26 = vector.multi_reduction <add>, %25, %cst_5 [0] : vector<8x128xf32> to vector<128xf32>
    %27 = vector.shape_cast %26 : vector<128xf32> to vector<1x128xf32>
    %c0_6 = arith.constant 0 : index
    %c0_7 = arith.constant 0 : index
    %28 = vector.load %arg6[%c0_6, %c0_7] : memref<8x1xf32, #tpu.memory_space<vmem>>, vector<8x1xf32>
    %29 = vector.broadcast %28 : vector<8x1xf32> to vector<8x128xf32>
    %30 = arith.mulf %15, %29 : vector<8x128xf32>
    %cst_8 = arith.constant dense<0.000000e+00> : vector<128xf32>
    %31 = vector.multi_reduction <add>, %30, %cst_8 [0] : vector<8x128xf32> to vector<128xf32>
    %32 = vector.shape_cast %31 : vector<128xf32> to vector<1x128xf32>
    %33 = vector.broadcast %28 : vector<8x1xf32> to vector<8x128xf32>
    %34 = arith.mulf %19, %33 : vector<8x128xf32>
    %cst_9 = arith.constant dense<0.000000e+00> : vector<128xf32>
    %35 = vector.multi_reduction <add>, %34, %cst_9 [0] : vector<8x128xf32> to vector<128xf32>
    %36 = vector.shape_cast %35 : vector<128xf32> to vector<1x128xf32>
    %37 = arith.subf %32, %36 : vector<1x128xf32>
    %38 = arith.subf %24, %27 : vector<1x128xf32>
    %cst_10 = arith.constant 2.000000e+00 : f32
    %39 = vector.broadcast %cst_10 : f32 to vector<1x128xf32>
    %40 = arith.mulf %39, %38 : vector<1x128xf32>
    %41 = arith.subf %37, %40 : vector<1x128xf32>
    %cst_11 = arith.constant 1.000000e+00 : f32
    %42 = vector.broadcast %cst_11 : f32 to vector<1x128xf32>
    %43 = arith.addf %41, %42 : vector<1x128xf32>
    %cst_12 = arith.constant 0.000000e+00 : f32
    %44 = vector.broadcast %cst_12 : f32 to vector<1x128xf32>
    %45 = arith.maximumf %43, %44 : vector<1x128xf32>
    %46 = tpu.iota {dimensions = array<i32: 1>} : vector<1x128xi32>
    %c128_i32 = arith.constant 128 : i32
    %47 = arith.muli %arg0, %c128_i32 : i32
    %48 = vector.broadcast %47 : i32 to vector<1x128xi32>
    %49 = arith.addi %48, %46 : vector<1x128xi32>
    %c0_13 = arith.constant 0 : index
    %50 = memref.load %arg1[%c0_13] : memref<1xi32, #tpu.memory_space<smem>>
    %51 = vector.broadcast %50 : i32 to vector<1x128xi32>
    %52 = arith.cmpi slt, %49, %51 : vector<1x128xi32>
    %c0_14 = arith.constant 0 : index
    %c0_15 = arith.constant 0 : index
    %53 = vector.load %arg7[%c0_14, %c0_15] : memref<1x128xf32, #tpu.memory_space<vmem>>, vector<1x128xf32>
    %cst_16 = arith.constant 0.000000e+00 : f32
    %54 = vector.broadcast %cst_16 : f32 to vector<1x128xf32>
    %55 = arith.select %52, %45, %54 : vector<1x128xi1>, vector<1x128xf32>
    %56 = arith.addf %53, %55 : vector<1x128xf32>
    %c0_17 = arith.constant 0 : index
    %c0_18 = arith.constant 0 : index
    %57 = vector.load %arg7[%c0_17, %c0_18] : memref<1x128xf32, #tpu.memory_space<vmem>>, vector<1x128xf32>
    tpu.vector_store %arg7[%c0_17, %c0_18], %56 {strides = array<i32>} : memref<1x128xf32, #tpu.memory_space<vmem>>, vector<1x128xf32>,
    %c0_i32_19 = arith.constant 0 : i32
    %58 = arith.cmpi eq, %arg0, %c0_i32_19 : i32
    %59 = arith.extui %58 : i1 to i32
    %c0_i32_20 = arith.constant 0 : i32
    %60 = arith.cmpi ne, %59, %c0_i32_20 : i32
    scf.if %60 {
      %c0_21 = arith.constant 0 : index
      %c0_22 = arith.constant 0 : index
      %61 = vector.load %arg7[%c0_21, %c0_22] : memref<1x128xf32, #tpu.memory_space<vmem>>, vector<1x128xf32>
      %cst_23 = arith.constant dense<0.000000e+00> : vector<1xf32>
      %62 = vector.multi_reduction <add>, %61, %cst_23 [1] : vector<1x128xf32> to vector<1xf32>
      %63 = vector.shape_cast %62 : vector<1xf32> to vector<1x1xf32>
      %c0_24 = arith.constant 0 : index
      %64 = memref.load %arg1[%c0_24] : memref<1xi32, #tpu.memory_space<smem>>
      %c1_i32 = arith.constant 1 : i32
      %65 = arith.maxsi %64, %c1_i32 : i32
      %66 = arith.sitofp %65 : i32 to f32
      %67 = vector.broadcast %66 : f32 to vector<1x1xf32>
      %68 = arith.divf %63, %67 : vector<1x1xf32>
      %c0_25 = arith.constant 0 : index
      %c0_26 = arith.constant 0 : index
      %69 = vector.load %arg4[%c0_25, %c0_26] : memref<1x1xf32, #tpu.memory_space<vmem>>, vector<1x1xf32>
      tpu.vector_store %arg4[%c0_25, %c0_26], %68 {strides = array<i32>} : memref<1x1xf32, #tpu.memory_space<vmem>>, vector<1x1xf32>,
    } else {
    }
    return
  }
  func.func @transform_0(%arg0: i32, %arg1: memref<1xi32, #tpu.memory_space<smem>>) -> (i32, i32) {
    %c0_i32 = arith.constant 0 : i32
    %c0_i32_0 = arith.constant 0 : i32
    return %c0_i32, %arg0 : i32, i32
  }
  func.func @transform_1(%arg0: i32, %arg1: memref<1xi32, #tpu.memory_space<smem>>) -> (i32, i32) {
    %c0_i32 = arith.constant 0 : i32
    %c0_i32_0 = arith.constant 0 : i32
    %c0_i32_1 = arith.constant 0 : i32
    return %c0_i32, %c0_i32_0 : i32, i32
  }
  func.func @transform_2(%arg0: i32, %arg1: memref<1xi32, #tpu.memory_space<smem>>) -> (i32, i32) {
    %c0_i32 = arith.constant 0 : i32
    %c0_i32_0 = arith.constant 0 : i32
    %c0_i32_1 = arith.constant 0 : i32
    return %c0_i32, %c0_i32_0 : i32, i32
  }
}

</mosaic_0001>

<llo_original>
// kernel: tpu_custom_call.1
$region0: #{tpu_custom_call.1}
  #allocation0 [shape = 'u32[]', space=smem, size = 0x4, offset = 0x4, fixed_abs, tag = 'smem constant byte address 0x4 - core index']
  #allocation1 [shape = 'u32[144,128]{1,0:T(1,128)}', space=vmem, size = 0x12000, scoped, tag = 'internal scratch']
  #allocation2 [shape = 'f32[8,8]{1,0:T(8,128)}', space=vmem, size = 0x1000, scoped, tag = 'scratch operand']
  #allocation3 [shape = 'f32[8,1]{1,0:T(8,128)}', space=vmem, size = 0x1000, scoped, tag = 'scratch operand']
  #allocation4 [shape = 'f32[1,128]{1,0:T(1,128)}', space=vmem, size = 0x200, scoped, tag = 'scratch operand']
  #allocation5 [shape = 's32[1]{0}', space=sflag, size = 0x4, scoped, tag = 'scoped memory for tpu_custom_call.1']
  #allocation6 [shape = 's32[1]{0:T(128)S(6)}', space=smem, size = 0x200, scoped, tag = 'prefetched SMEM operand 0']
  %s0 = inlined_call_operand.<no memory space> [shape: s32[1], index: 0, kind: input, shape index: {}]
  %s1 = inlined_call_operand.hbm [shape: s32[3,128], index: 1, kind: input, shape index: {}]
  %s2 = inlined_call_operand.hbm [shape: f32[8,32], index: 2, kind: input, shape index: {}]
  %s3 = inlined_call_operand.hbm [shape: f32[1,1], index: 3, kind: output, shape index: {}]
  %s4 = sld [smem:[#allocation0]]
  $region34: #{tpu_custom_call.1} parent=0
    _
  %s6 = ssub.s32 1, %s4
  %s7 = scalar_select 0, %s6, %s4
  %8 = sst [smem:[#allocation6]] %s0
  $region1: #{tpu_custom_call.1} parent=0
    #allocation7 [shape = 'u8[2048]{0}', space=vmem, size = 0x800, scoped, tag = 'input window, operand 1, single buffered']
    #allocation8 [shape = 's32[1]{0}', space=sflag, size = 0x4, scoped, tag = 'scoped memory for tpu_custom_call.1']
    #allocation9 [shape = 's32[1]{0}', space=sflag, size = 0x4, scoped, tag = 'scoped memory for tpu_custom_call.1']
    #allocation10 [shape = 'u8[4096]{0}', space=vmem, size = 0x1000, scoped, tag = 'input window, operand 2, single buffered']
    #allocation11 [shape = 's32[1]{0}', space=sflag, size = 0x4, scoped, tag = 'scoped memory for tpu_custom_call.1']
    #allocation12 [shape = 'u8[512]{0}', space=vmem, size = 0x400, scoped, tag = 'output window, operand 0, single buffered']
    %9 = vsyncpa [#allocation8], 0
    %10 = vsyncpa [#allocation11], 0
    %11 = vsyncpa [#allocation9], 0
    // Predicated region
    $region2: #{tpu_custom_call.1} parent=1 // pred_check
      _
    $region3: #{tpu_custom_call.1} parent=1 // pred_check_branch
      %13 = sbr.rel (0) target = $region5
    $region4: #{tpu_custom_call.1} parent=1 // pred_region
      %s15 = ssub.s32 64, 64
      %16 = vsyncadd [#allocation8], %s15
      %s18 = sshll.u32 [#allocation7], 4
      %s19 = int_to_ptr.vmem [resolvable:$true] %s18
      %21 = dma.hbm_to_vmem [thread:$0]  %s1, 64, %s19, [#allocation8]
    $region5: #{tpu_custom_call.1} parent=1 // pred_fallthru
      _
    // Predicated region
    $region6: #{tpu_custom_call.1} parent=1 // pred_check
      _
    $region7: #{tpu_custom_call.1} parent=1 // pred_check_branch
      %23 = sbr.rel (0) target = $region9
    $region8: #{tpu_custom_call.1} parent=1 // pred_region
      %s25 = ssub.s32 128, 128
      %26 = vsyncadd [#allocation11], %s25
      %s28 = sshll.u32 [#allocation10], 4
      %s29 = int_to_ptr.vmem [resolvable:$true] %s28
      %31 = dma.hbm_to_vmem [thread:$0]  %s2, 128, %s29, [#allocation11]
    $region9: #{tpu_custom_call.1} parent=1 // pred_fallthru
      _
    // Predicated region
    $region10: #{tpu_custom_call.1} parent=1 // pred_check
      _
    $region11: #{tpu_custom_call.1} parent=1 // pred_check_branch
      %33 = sbr.rel (0) target = $region13
    $region12: #{tpu_custom_call.1} parent=1 // pred_region
      %34 = dma.done [#allocation8], 64
    $region13: #{tpu_custom_call.1} parent=1 // pred_fallthru
      _
    // Predicated region
    $region14: #{tpu_custom_call.1} parent=1 // pred_check
      _
    $region15: #{tpu_custom_call.1} parent=1 // pred_check_branch
      %36 = sbr.rel (0) target = $region17
    $region16: #{tpu_custom_call.1} parent=1 // pred_region
      %37 = dma.done [#allocation11], 128
    $region17: #{tpu_custom_call.1} parent=1 // pred_fallthru
      _
    %p38 = scmp.eq.s32.totalorder 0, 0
    // Predicated region
    $region18: #{tpu_custom_call.1} parent=1 // pred_check
      %p39 = pneg %p38
    $region19: #{tpu_custom_call.1} parent=1 // pred_check_branch
      %41 = sbr.rel (%p39) target = $region21
    $region20: #{tpu_custom_call.1} parent=1 // pred_region
      %v42 = vld [vmem:[#allocation10] sm:$0xff]
      %vm43 = vcmask 261120
      %v45 = vsel %vm43, %v42, 0
      %47 = vmatprep.subr.mxu0 0.0
      %48 = vmatpush1.xpose.msra.mxu0 %v45
      %49 = vmatprep.subr.mxu0 0.0
      %50 = vmatpush1.xpose.msra.mxu0 0.0
      %51 = vmatprep.subr.mxu0 0.0
      %52 = vmatpush1.xpose.msra.mxu0 0.0
      %53 = vmatprep.subr.mxu0 0.0
      %54 = vmatpush1.xpose.msra.mxu0 0.0
      %55 = vmatprep.subr.mxu0 0.0
      %56 = vmatpush1.xpose.msra.mxu0 0.0
      %57 = vmatprep.subr.mxu0 0.0
      %58 = vmatpush1.xpose.msra.mxu0 0.0
      %59 = vmatprep.subr.mxu0 0.0
      %60 = vmatpush1.xpose.msra.mxu0 0.0
      %61 = vmatprep.subr.mxu0 0.0
      %62 = vmatpush1.xpose.msra.mxu0 0.0
      %63 = vmatprep.subr.mxu0 0.0
      %64 = vmatpush1.xpose.msra.mxu0 0.0
      %65 = vmatprep.subr.mxu0 0.0
      %66 = vmatpush1.xpose.msra.mxu0 0.0
      %67 = vmatprep.subr.mxu0 0.0
      %68 = vmatpush1.xpose.msra.mxu0 0.0
      %69 = vmatprep.subr.mxu0 0.0
      %70 = vmatpush1.xpose.msra.mxu0 0.0
      %71 = vmatprep.subr.mxu0 0.0
      %72 = vmatpush1.xpose.msra.mxu0 0.0
      %73 = vmatprep.subr.mxu0 0.0
      %74 = vmatpush1.xpose.msra.mxu0 0.0
      %75 = vmatprep.subr.mxu0 0.0
      %76 = vmatpush1.xpose.msra.mxu0 0.0
      %77 = vmatprep.subr.mxu0 0.0
      %78 = vmatpush1.xpose.msra.mxu0 0.0
      %79 = vmatprep.subr.mxu0 0.0
      %80 = vmatpush1.xpose.msra.mxu0 0.0
      %81 = vmatprep.subr.mxu0 0.0
      %82 = vmatpush1.xpose.msra.mxu0 0.0
      %83 = vmatprep.subr.mxu0 0.0
      %84 = vmatpush1.xpose.msra.mxu0 0.0
      %85 = vmatprep.subr.mxu0 0.0
      %86 = vmatpush1.xpose.msra.mxu0 0.0
      %87 = vmatprep.subr.mxu0 0.0
      %88 = vmatpush1.xpose.msra.mxu0 0.0
      %89 = vmatprep.subr.mxu0 0.0
      %90 = vmatpush1.xpose.msra.mxu0 0.0
      %91 = vmatprep.subr.mxu0 0.0
      %92 = vmatpush1.xpose.msra.mxu0 0.0
      %93 = vmatprep.subr.mxu0 0.0
      %94 = vmatpush1.xpose.msra.mxu0 0.0
      %95 = vmatprep.subr.mxu0 0.0
      %96 = vmatpush1.xpose.msra.mxu0 0.0
      %97 = vmatprep.subr.mxu0 0.0
      %98 = vmatpush1.xpose.msra.mxu0 0.0
      %99 = vmatprep.subr.mxu0 0.0
      %100 = vmatpush1.xpose.msra.mxu0 0.0
      %101 = vmatprep.subr.mxu0 0.0
      %102 = vmatpush1.xpose.msra.mxu0 0.0
      %103 = vmatprep.subr.mxu0 0.0
      %104 = vmatpush1.xpose.msra.mxu0 0.0
      %105 = vmatprep.subr.mxu0 0.0
      %106 = vmatpush1.xpose.msra.mxu0 0.0
      %107 = vmatprep.subr.mxu0 0.0
      %108 = vmatpush1.xpose.msra.mxu0 0.0
      %109 = vmatprep.subr.mxu0 0.0
      %110 = vmatpush1.xpose.msra.mxu0 0.0
      %111 = vmatprep.mubr.f32.mxu0 0.0
      %112 = vmatmul.mubr.f32.gmra.mrb[0].mxu0 %v45
      %v113 = vpop.f32.mrb[0].mxu0
      %v114 = vadd.f32 0.0, %v113
      %v115 = vpop.f32.mrb[0].mxu0
      %116 = vdwg.mxu0
      %vm117 = vcmask 64512
      %118 = vst.msk [vmem:[#allocation2] sm:$0xff] %vm117, %v114
      %v119 = vmul.f32 %v42, %v42
      %v120 = vsel %vm43, %v119, 0.0
      %121 = vadd.xlane.f32.xlu0 %v120
      %v122 = vpop.xlane.xlu0 %121
      %vm123 = vcmask 7168
      %124 = vst.msk [vmem:[#allocation3] sm:$0xff] %vm123, %v122
      %125 = vst [vmem:[#allocation4] sm:$0x1] 0.0
    $region21: #{tpu_custom_call.1} parent=1 // pred_fallthru
      _
    %v126 = vld [vmem:[#allocation7] sm:$0x7]
    %v127 = vlaneseq
    %v128 = vshrl.u32 %v127, 7
    %v129 = vlaneseq
    %v130 = vshrl.u32 %v129, 7
    %v131 = vsub.s32 0, %v130
    %v132 = vrot.slane %v126, %v131
    %vm133 = vcmp.eq.s32.totalorder %v128, %v132
    %v134 = vsel %vm133, 1, 0
    %v135 = vcvt.s32.f32 %v134
    %v136 = vlaneseq
    %v137 = vshrl.u32 %v136, 7
    %v138 = vsub.s32 1, %v137
    %v139 = vrot.slane %v126, %v138
    %vm140 = vcmp.eq.s32.totalorder %v128, %v139
    %v141 = vsel %vm140, 1, 0
    %v142 = vcvt.s32.f32 %v141
    %v143 = vlaneseq
    %v144 = vshrl.u32 %v143, 7
    %v145 = vsub.s32 2, %v144
    %v146 = vrot.slane %v126, %v145
    %vm147 = vcmp.eq.s32.totalorder %v128, %v146
    %v148 = vsel %vm147, 1, 0
    %v149 = vcvt.s32.f32 %v148
    %v150 = vld [vmem:[#allocation2] sm:$0xff]
    %vm151 = vcmask 64512
    %v153 = vsel %vm151, %v150, 0
    %155 = vmatprep.subr.mxu0 0.0
    %156 = vmatpush1.msra.mxu0 %v135
    %157 = vmatprep.subr.mxu0 0.0
    %158 = vmatpush1.msra.mxu0 0.0
    %159 = vmatprep.subr.mxu0 0.0
    %160 = vmatpush1.msra.mxu0 0.0
    %161 = vmatprep.subr.mxu0 0.0
    %162 = vmatpush1.msra.mxu0 0.0
    %163 = vmatprep.subr.mxu0 0.0
    %164 = vmatpush1.msra.mxu0 0.0
    %165 = vmatprep.subr.mxu0 0.0
    %166 = vmatpush1.msra.mxu0 0.0
    %167 = vmatprep.subr.mxu0 0.0
    %168 = vmatpush1.msra.mxu0 0.0
    %169 = vmatprep.subr.mxu0 0.0
    %170 = vmatpush1.msra.mxu0 0.0
    %171 = vmatprep.subr.mxu0 0.0
    %172 = vmatpush1.msra.mxu0 0.0
    %173 = vmatprep.subr.mxu0 0.0
    %174 = vmatpush1.msra.mxu0 0.0
    %175 = vmatprep.subr.mxu0 0.0
    %176 = vmatpush1.msra.mxu0 0.0
    %177 = vmatprep.subr.mxu0 0.0
    %178 = vmatpush1.msra.mxu0 0.0
    %179 = vmatprep.subr.mxu0 0.0
    %180 = vmatpush1.msra.mxu0 0.0
    %181 = vmatprep.subr.mxu0 0.0
    %182 = vmatpush1.msra.mxu0 0.0
    %183 = vmatprep.subr.mxu0 0.0
    %184 = vmatpush1.msra.mxu0 0.0
    %185 = vmatprep.subr.mxu0 0.0
    %186 = vmatpush1.msra.mxu0 0.0
    %187 = vmatprep.subr.mxu0 0.0
    %188 = vmatpush1.msra.mxu0 0.0
    %189 = vmatprep.subr.mxu0 0.0
    %190 = vmatpush1.msra.mxu0 0.0
    %191 = vmatprep.subr.mxu0 0.0
    %192 = vmatpush1.msra.mxu0 0.0
    %193 = vmatprep.subr.mxu0 0.0
    %194 = vmatpush1.msra.mxu0 0.0
    %195 = vmatprep.subr.mxu0 0.0
    %196 = vmatpush1.msra.mxu0 0.0
    %197 = vmatprep.subr.mxu0 0.0
    %198 = vmatpush1.msra.mxu0 0.0
    %199 = vmatprep.subr.mxu0 0.0
    %200 = vmatpush1.msra.mxu0 0.0
    %201 = vmatprep.subr.mxu0 0.0
    %202 = vmatpush1.msra.mxu0 0.0
    %203 = vmatprep.subr.mxu0 0.0
    %204 = vmatpush1.msra.mxu0 0.0
    %205 = vmatprep.subr.mxu0 0.0
    %206 = vmatpush1.msra.mxu0 0.0
    %207 = vmatprep.subr.mxu0 0.0
    %208 = vmatpush1.msra.mxu0 0.0
    %209 = vmatprep.subr.mxu0 0.0
    %210 = vmatpush1.msra.mxu0 0.0
    %211 = vmatprep.subr.mxu0 0.0
    %212 = vmatpush1.msra.mxu0 0.0
    %213 = vmatprep.subr.mxu0 0.0
    %214 = vmatpush1.msra.mxu0 0.0
    %215 = vmatprep.subr.mxu0 0.0
    %216 = vmatpush1.msra.mxu0 0.0
    %217 = vmatprep.subr.mxu0 0.0
    %218 = vmatpush1.msra.mxu0 0.0
    %219 = vmatprep.mubr.f32.mxu0 0.0
    %220 = vmatmul.mubr.f32.gmra.mrb[0].mxu0 %v153
    %v221 = vpop.f32.mrb[0].mxu0
    %v222 = vadd.f32 0.0, %v221
    %v223 = vpop.f32.mrb[0].mxu0
    %224 = vdwg.mxu0
    %v225 = vmul.f32 %v142, %v222
    %v226 = vrot.slane %v225, 4
    %v227 = vadd.f32 %v225, %v226
    %v228 = vrot.slane %v227, 2
    %v229 = vadd.f32 %v227, %v228
    %v230 = vrot.slane %v229, 1
    %v231 = vadd.f32 %v229, %v230
    %v232 = vmul.f32 %v149, %v222
    %v233 = vrot.slane %v232, 4
    %v234 = vadd.f32 %v232, %v233
    %v235 = vrot.slane %v234, 2
    %v236 = vadd.f32 %v234, %v235
    %v237 = vrot.slane %v236, 1
    %v238 = vadd.f32 %v236, %v237
    %v239 = vld [vmem:[#allocation3] sm:$0xff]
    %241 = vset.pattern.permute.xlu0 0
    %242 = vperm.xlu0 %241, %v239
    %v243 = vpop.permute.xlu0 %242
    %v245 = vmul.f32 %v142, %v243
    %v246 = vrot.slane %v245, 4
    %v247 = vadd.f32 %v245, %v246
    %v248 = vrot.slane %v247, 2
    %v249 = vadd.f32 %v247, %v248
    %v250 = vrot.slane %v249, 1
    %v251 = vadd.f32 %v249, %v250
    %v252 = vmul.f32 %v149, %v243
    %v253 = vrot.slane %v252, 4
    %v254 = vadd.f32 %v252, %v253
    %v255 = vrot.slane %v254, 2
    %v256 = vadd.f32 %v254, %v255
    %v257 = vrot.slane %v256, 1
    %v258 = vadd.f32 %v256, %v257
    %v259 = vsub.f32 %v251, %v258
    %v260 = vsub.f32 %v231, %v238
    %v261 = vmul.f32 %v260, 2.0
    %v262 = vsub.f32 %v259, %v261
    %v263 = vadd.f32 %v262, 1.0
    %v264 = vmax.f32 %v263, 0.0
    %v265 = vlaneseq
    %v266 = vand.u32 %v265, 127
    %s267 = smul.u32 0, 128
    %v268 = vstv %s267
    %v269 = vadd.s32 %v268, %v266
    %s270 = sld [smem:[#allocation6]]
    %v271 = vstv %s270
    %vm272 = vcmp.lt.s32.totalorder %v269, %v271
    %v273 = vld [vmem:[#allocation4] sm:$0x1]
    %v274 = vsel %vm272, %v264, 0.0
    %v275 = vadd.f32 %v273, %v274
    %276 = vst [vmem:[#allocation4] sm:$0x1] %v275
    // Predicated region
    $region22: #{tpu_custom_call.1} parent=1 // pred_check
      %p277 = pneg %p38
    $region23: #{tpu_custom_call.1} parent=1 // pred_check_branch
      %279 = sbr.rel (%p277) target = $region25
    $region24: #{tpu_custom_call.1} parent=1 // pred_region
      %v280 = vld [vmem:[#allocation4] sm:$0x1]
      %vm281 = vcmask 1040384
      %v282 = vsel %vm281, %v280, 0.0
      %283 = vadd.xlane.f32.xlu0 %v282
      %v284 = vpop.xlane.xlu0 %283
      %s285 = sld [smem:[#allocation6]]
      %p286 = scmp.gt.s32.totalorder %s285, 1
      %s287 = scalar_select %p286, %s285, 1
      %s288 = scvt.s32.f32 %s287
      %v289 = vstv %s288
      %v290 = vrcp.pop %v289
      %v291 = vmul.f32 %v284, %v290
      %vm292 = vcmask 0
      %293 = vst.msk [vmem:[#allocation12] sm:$0x1] %vm292, %v291
    $region25: #{tpu_custom_call.1} parent=1 // pred_fallthru
      _
    // Predicated region
    $region26: #{tpu_custom_call.1} parent=1 // pred_check
      _
    $region27: #{tpu_custom_call.1} parent=1 // pred_check_branch
      %295 = sbr.rel (0) target = $region29
    $region28: #{tpu_custom_call.1} parent=1 // pred_region
      %s297 = ssub.s32 16, 16
      %298 = vsyncadd [#allocation9], %s297
      %s300 = sshll.u32 [#allocation12], 4
      %s301 = int_to_ptr.vmem [resolvable:$true] %s300
      %303 = dma.vmem_to_hbm [thread:$0]  %s301, 16, %s3, [#allocation9]
    $region29: #{tpu_custom_call.1} parent=1 // pred_fallthru
      _
    // Predicated region
    $region30: #{tpu_custom_call.1} parent=1 // pred_check
      _
    $region31: #{tpu_custom_call.1} parent=1 // pred_check_branch
      %305 = sbr.rel (0) target = $region33
    $region32: #{tpu_custom_call.1} parent=1 // pred_region
      %306 = dma.done [#allocation9], 16
    $region33: #{tpu_custom_call.1} parent=1 // pred_fallthru
      _
    %307 = vsyncpa [#allocation8], 1
    %308 = vsyncpa [#allocation11], 1
    %309 = vsyncpa [#allocation9], 1

</llo_original>
